<compile_context>
chip_gen: v6e
topology: v6e:2x2x1
jax: 0.10.0
libtpu: 0.0.40
codegen_flags: <defaults>
</compile_context>

<pallas_src>
import math

import jax
import jax.numpy as jnp
import numpy as np
from jax import lax
from jax.experimental import pallas as pl
from jax.experimental.pallas import tpu as pltpu

TWO_PI = 2.0 * math.pi
TWO_PI_SQ = TWO_PI * TWO_PI

_LANES = 128
_MIN_ROWS = 8            # one (8, 128) f32 tile
_MAX_BLOCK_ROWS = 2048   # 2048*128*4 B = 1 MiB per parameter plane per block


def _ewald_error_kernel(scalars_ref, s_ref, l_ref, c_ref, out_ref):
    """Elementwise Ewald error bound over (block_rows, 128) candidate tiles.

    scalars_ref : SMEM f32[2]                 = [c_k, c_r]
    s_ref/l_ref/c_ref : VMEM f32[br, 128]     = smearing / lr_wavelength / cutoff
    out_ref     : VMEM f32[br, 128]           = sqrt(err_k^2 + err_r^2)
    """
    c_k = scalars_ref[0]
    c_r = scalars_ref[1]

    smearing = s_ref[...]
    lrwl = l_ref[...]
    cutoff = c_ref[...]

    # Exact reciprocal for smearing: it is squared and sits inside both
    # exponentials with coefficients of O(100), so approx-vrcp error would be
    # amplified well past the accuracy target.
    inv_s = pl.reciprocal(smearing, approx=False)
    inv_s2 = inv_s * inv_s
    s2 = smearing * smearing

    # One rsqrt push gives both sqrt(lrwl) and 1/lrwl (one fewer EUP op/vreg).
    r_l = lax.rsqrt(lrwl)
    sqrt_l = lrwl * r_l
    inv_l = r_l * r_l

    # err_k^2 = prefac/((2pi)^2 V) * sqrt(lrwl)/s^2 * exp(-2 (2pi)^2 s^2/lrwl)
    err_k2 = (c_k * sqrt_l) * inv_s2 * jnp.exp(
        (-2.0 * TWO_PI_SQ) * (s2 * inv_l)
    )
    # err_r^2 = prefac^2 / (V cutoff) * exp(-cutoff^2 / s^2); the reciprocal of
    # cutoff only scales the term, so the approx vrcp path is accurate enough.
    err_r2 = (c_r * pl.reciprocal(cutoff, approx=True)) * jnp.exp(
        -(cutoff * cutoff) * inv_s2
    )

    # NOTE: squared-error form halves the f32 dynamic range; fine for typical
    # tuning accuracies (1e-4 .. 1e-8) — bounds below ~1e-19 underflow to 0.
    out_ref[...] = jnp.sqrt(err_k2 + err_r2)


def _pick_block_rows(rows: int) -> int:
    """Row-block size: big DMA blocks, but >=2 blocks when splittable (v7x)."""
    if rows <= _MIN_ROWS:
        return _MIN_ROWS
    half = -(-rows // 2)                         # ceil(rows / 2)
    half = -(-half // _MIN_ROWS) * _MIN_ROWS     # round up to sublane multiple
    return min(_MAX_BLOCK_ROWS, half)


class TuningErrorBounds:
    """Base class: stores charges / cell / positions; forward delegates to error()."""

    def __init__(self, charges, cell, positions):
        self._charges = charges      # (N, 1)
        self._cell = cell            # (3, 3)
        self._positions = positions  # (N, 3)

    def __call__(self, *args, **kwargs):
        return self.error(*args, **kwargs)

    def forward(self, *args, **kwargs):
        return self.error(*args, **kwargs)

    def error(self, *args, **kwargs):
        # TODO(synk): abstract in the PyTorch spec (raises NotImplementedError);
        # the concrete Ewald bound below provides the Pallas hot path.
        raise NotImplementedError


class EwaldErrorBounds(TuningErrorBounds):
    """Concrete Ewald error bound; the candidate sweep runs in a Pallas kernel."""

    def error(self, smearing, lr_wavelength, cutoff):
        charges = jnp.asarray(self._charges, jnp.float32)
        cell = jnp.asarray(self._cell, jnp.float32)
        n_atoms = int(np.asarray(self._positions).shape[0])

        # --- hoisted scalar prefactors (tiny XLA glue, computed once) --------
        volume = jnp.abs(jnp.linalg.det(cell)).astype(jnp.float32)
        q2sum = jnp.sum(charges * charges)
        prefac = (2.0 / math.sqrt(float(n_atoms))) * q2sum
        c_k = prefac / (TWO_PI_SQ * volume)   # Fourier-space prefactor
        c_r = (prefac * prefac) / volume      # real-space prefactor (squared form)
        scalars = jnp.stack([c_k, c_r]).astype(jnp.float32)

        # --- candidate parameter sweep --------------------------------------
        smearing = jnp.asarray(smearing, jnp.float32)
        lr_wavelength = jnp.asarray(lr_wavelength, jnp.float32)
        cutoff = jnp.asarray(cutoff, jnp.float32)
        out_shape = jnp.broadcast_shapes(
            smearing.shape, lr_wavelength.shape, cutoff.shape
        )
        n_params = int(np.prod(out_shape)) if out_shape else 1

        rows = max(1, -(-n_params // _LANES))
        block_rows = _pick_block_rows(rows)
        n_blocks = -(-rows // block_rows)
        rows_padded = n_blocks * block_rows
        total = rows_padded * _LANES

        # TODO(synk): for the tuner's outer-product sweep (small 1-D smearing /
        # lr_wavelength / cutoff axes) the combinations could be formed
        # in-kernel over a 3-D grid instead of materializing P-sized inputs;
        # error() keeps the general broadcast semantics of the PyTorch module.
        def _plane(x):
            x = jnp.broadcast_to(x, out_shape).reshape(-1)
            # Single fused pad per input (value 1.0 keeps pad lanes finite);
            # no packed jnp.stack copy before the kernel reads it.
            x = jnp.pad(x, (0, total - n_params), constant_values=1.0)
            return x.reshape(rows_padded, _LANES)

        s2d = _plane(smearing)
        l2d = _plane(lr_wavelength)
        c2d = _plane(cutoff)

        row_spec = pl.BlockSpec((block_rows, _LANES), lambda i: (i, 0))
        out = pl.pallas_call(
            _ewald_error_kernel,
            out_shape=jax.ShapeDtypeStruct((rows_padded, _LANES), jnp.float32),
            grid=(n_blocks,),
            in_specs=[
                pl.BlockSpec(memory_space=pltpu.MemorySpace.SMEM),  # [c_k, c_r]
                row_spec,   # smearing plane
                row_spec,   # lr_wavelength plane
                row_spec,   # cutoff plane
            ],
            out_specs=row_spec,
            compiler_params=pltpu.CompilerParams(
                dimension_semantics=("parallel",),
                # explicit limit so v5e's 16 MiB default never binds; 2048-row
                # blocks double-buffered need ~8 MiB.
                vmem_limit_bytes=32 * 1024 * 1024,
            ),
        )(scalars, s2d, l2d, c2d)

        return out.reshape(-1)[:n_params].reshape(out_shape)


def _reference(charges, cell, positions, smearing, lrwl, cutoff):
    charges = np.asarray(charges, np.float64)
    cell = np.asarray(cell, np.float64)
    n = np.asarray(positions).shape[0]
    volume = abs(np.linalg.det(cell))
    prefac = 2.0 * np.sum(charges ** 2) / math.sqrt(n)
    err_k = (
        prefac ** 0.5 / smearing
        / np.sqrt(TWO_PI ** 2 * volume / np.sqrt(lrwl))
        * np.exp(-(TWO_PI ** 2) * smearing ** 2 / lrwl)
    )
    err_r = (
        prefac / np.sqrt(cutoff * volume)
        * np.exp(-(cutoff ** 2) / 2.0 / smearing ** 2)
    )
    return np.sqrt(err_k ** 2 + err_r ** 2)


if __name__ == "__main__":
    key = jax.random.PRNGKey(0)
    k1, k2, k3, k4, k5 = jax.random.split(key, 5)

    N = 8  # atoms
    charges = jax.random.normal(k1, (N, 1), jnp.float32)
    positions = jax.random.uniform(k2, (N, 3), jnp.float32) * 4.0
    cell = 4.0 * jnp.eye(3, dtype=jnp.float32) + 0.1 * jax.random.normal(
        k3, (3, 3), jnp.float32
    )
    bounds = EwaldErrorBounds(charges, cell, positions)

    # Two sweep sizes: P=200 exercises lane/row padding with a single block;
    # P=3000 exercises the padded multi-block ("parallel") path.
    for P in (200, 3000):
        ka, kb = jax.random.split(jax.random.fold_in(k4, P))
        smearing = 0.5 + 1.5 * jax.random.uniform(ka, (P,), jnp.float32)
        lr_wavelength = 0.5 + 4.5 * jax.random.uniform(kb, (P,), jnp.float32)
        cutoff = jnp.linspace(3.0, 6.0, P, dtype=jnp.float32)

        err = bounds(smearing, lr_wavelength, cutoff)
        err = jax.block_until_ready(err)

        ref = _reference(
            np.array(charges), np.array(cell), np.array(positions),
            np.array(smearing, np.float64), np.array(lr_wavelength, np.float64),
            np.array(cutoff, np.float64),
        )
        np.testing.assert_allclose(
            np.array(err, np.float64), ref, rtol=2e-3, atol=1e-12
        )

    print("KERNEL_OK")
</pallas_src>

<mosaic_0001>
module attributes {stable_mosaic.version = 11 : i64} {
  func.func @_ewald_error_kernel(%arg0: i32, %arg1: memref<2xf32, #tpu.memory_space<smem>>, %arg2: memref<8x128xf32, #tpu.memory_space<vmem>>, %arg3: memref<8x128xf32, #tpu.memory_space<vmem>>, %arg4: memref<8x128xf32, #tpu.memory_space<vmem>>, %arg5: memref<8x128xf32, #tpu.memory_space<vmem>>) attributes {dimension_semantics = [#tpu.dimension_semantics<parallel>], iteration_bounds = array<i64: 1>, scalar_prefetch = 0 : i64, scratch_operands = 0 : i64, tpu.core_type = #tpu.core_type<tc>, window_params = [{transform_indices = @transform_0, window_bounds = array<i64: 2>}, {transform_indices = @transform_1, window_bounds = array<i64: 8, 128>}, {transform_indices = @transform_2, window_bounds = array<i64: 8, 128>}, {transform_indices = @transform_3, window_bounds = array<i64: 8, 128>}, {transform_indices = @transform_4, window_bounds = array<i64: 8, 128>}]} {
    %c0 = arith.constant 0 : index
    %0 = memref.load %arg1[%c0] : memref<2xf32, #tpu.memory_space<smem>>
    %c1 = arith.constant 1 : index
    %1 = memref.load %arg1[%c1] : memref<2xf32, #tpu.memory_space<smem>>
    %c0_0 = arith.constant 0 : index
    %c0_1 = arith.constant 0 : index
    %2 = vector.load %arg2[%c0_0, %c0_1] : memref<8x128xf32, #tpu.memory_space<vmem>>, vector<8x128xf32>
    %c0_2 = arith.constant 0 : index
    %c0_3 = arith.constant 0 : index
    %3 = vector.load %arg3[%c0_2, %c0_3] : memref<8x128xf32, #tpu.memory_space<vmem>>, vector<8x128xf32>
    %c0_4 = arith.constant 0 : index
    %c0_5 = arith.constant 0 : index
    %4 = vector.load %arg4[%c0_4, %c0_5] : memref<8x128xf32, #tpu.memory_space<vmem>>, vector<8x128xf32>
    %5 = tpu.reciprocal %2 : vector<8x128xf32> -> vector<8x128xf32>
    %6 = arith.mulf %5, %5 : vector<8x128xf32>
    %7 = arith.mulf %2, %2 : vector<8x128xf32>
    %8 = math.rsqrt %3 : vector<8x128xf32>
    %9 = arith.mulf %3, %8 : vector<8x128xf32>
    %10 = arith.mulf %8, %8 : vector<8x128xf32>
    %11 = vector.broadcast %0 : f32 to vector<8x128xf32>
    %12 = arith.mulf %11, %9 : vector<8x128xf32>
    %13 = arith.mulf %12, %6 : vector<8x128xf32>
    %14 = arith.mulf %7, %10 : vector<8x128xf32>
    %cst = arith.constant -78.9568328 : f32
    %15 = vector.broadcast %cst : f32 to vector<8x128xf32>
    %16 = arith.mulf %15, %14 : vector<8x128xf32>
    %17 = math.exp %16 : vector<8x128xf32>
    %18 = arith.mulf %13, %17 : vector<8x128xf32>
    %19 = tpu.reciprocal %4 {approx = true} : vector<8x128xf32> -> vector<8x128xf32>
    %20 = vector.broadcast %1 : f32 to vector<8x128xf32>
    %21 = arith.mulf %20, %19 : vector<8x128xf32>
    %22 = arith.mulf %4, %4 : vector<8x128xf32>
    %cst_6 = arith.constant 0.000000e+00 : f32
    %23 = vector.broadcast %cst_6 : f32 to vector<8x128xf32>
    %24 = arith.subf %23, %22 : vector<8x128xf32>
    %25 = arith.mulf %24, %6 : vector<8x128xf32>
    %26 = math.exp %25 : vector<8x128xf32>
    %27 = arith.mulf %21, %26 : vector<8x128xf32>
    %28 = arith.addf %18, %27 : vector<8x128xf32>
    %29 = math.sqrt %28 : vector<8x128xf32>
    %c0_7 = arith.constant 0 : index
    %c0_8 = arith.constant 0 : index
    %30 = vector.load %arg5[%c0_7, %c0_8] : memref<8x128xf32, #tpu.memory_space<vmem>>, vector<8x128xf32>
    tpu.vector_store %arg5[%c0_7, %c0_8], %29 {strides = array<i32>} : memref<8x128xf32, #tpu.memory_space<vmem>>, vector<8x128xf32>,
    return
  }
  func.func @transform_0(%arg0: i32) -> i32 {
    %c0_i32 = arith.constant 0 : i32
    %c0_i32_0 = arith.constant 0 : i32
    return %c0_i32 : i32
  }
  func.func @transform_1(%arg0: i32) -> (i32, i32) {
    %c0_i32 = arith.constant 0 : i32
    %c0_i32_0 = arith.constant 0 : i32
    return %arg0, %c0_i32 : i32, i32
  }
  func.func @transform_2(%arg0: i32) -> (i32, i32) {
    %c0_i32 = arith.constant 0 : i32
    %c0_i32_0 = arith.constant 0 : i32
    return %arg0, %c0_i32 : i32, i32
  }
  func.func @transform_3(%arg0: i32) -> (i32, i32) {
    %c0_i32 = arith.constant 0 : i32
    %c0_i32_0 = arith.constant 0 : i32
    return %arg0, %c0_i32 : i32, i32
  }
  func.func @transform_4(%arg0: i32) -> (i32, i32) {
    %c0_i32 = arith.constant 0 : i32
    %c0_i32_0 = arith.constant 0 : i32
    return %arg0, %c0_i32 : i32, i32
  }
}

</mosaic_0001>

<llo_original>
// kernel: tpu_custom_call.1
$region0: #{tpu_custom_call.1}
  #allocation0 [shape = 'u32[]', space=smem, size = 0x4, offset = 0x4, fixed_abs, tag = 'smem constant byte address 0x4 - core index']
  #allocation1 [shape = 'u32[144,128]{1,0:T(1,128)}', space=vmem, size = 0x12000, scoped, tag = 'internal scratch']
  %s0 = inlined_call_operand.hbm [shape: f32[2], index: 0, kind: input, shape index: {}]
  %s1 = inlined_call_operand.hbm [shape: f32[8,128], index: 1, kind: input, shape index: {}]
  %s2 = inlined_call_operand.hbm [shape: f32[8,128], index: 2, kind: input, shape index: {}]
  %s3 = inlined_call_operand.hbm [shape: f32[8,128], index: 3, kind: input, shape index: {}]
  %s4 = inlined_call_operand.hbm [shape: f32[8,128], index: 4, kind: output, shape index: {}]
  %s5 = sld [smem:[#allocation0]]
  $region42: #{tpu_custom_call.1} parent=0
    _
  %s7 = ssub.s32 1, %s5
  %s8 = scalar_select 0, %s7, %s5
  $region1: #{tpu_custom_call.1} parent=0
    #allocation2 [shape = 'u8[512]{0}', space=smem, size = 0x200, scoped, tag = 'input window, operand 0, single buffered']
    #allocation3 [shape = 's32[1]{0}', space=sflag, size = 0x4, scoped, tag = 'scoped memory for tpu_custom_call.1']
    #allocation4 [shape = 's32[1]{0}', space=sflag, size = 0x4, scoped, tag = 'scoped memory for tpu_custom_call.1']
    #allocation5 [shape = 's32[1]{0}', space=sflag, size = 0x4, scoped, tag = 'scoped memory for tpu_custom_call.1']
    #allocation6 [shape = 'u8[4096]{0}', space=vmem, size = 0x1000, scoped, tag = 'input window, operand 1, single buffered']
    #allocation7 [shape = 'u8[4096]{0}', space=vmem, size = 0x1000, scoped, tag = 'input window, operand 2, single buffered']
    #allocation8 [shape = 's32[1]{0}', space=sflag, size = 0x4, scoped, tag = 'scoped memory for tpu_custom_call.1']
    #allocation9 [shape = 'u8[4096]{0}', space=vmem, size = 0x1000, scoped, tag = 'input window, operand 3, single buffered']
    #allocation10 [shape = 'u8[4096]{0}', space=vmem, size = 0x1000, scoped, tag = 'output window, operand 0, single buffered']
    %9 = vsyncpa [#allocation5], 0
    %10 = vsyncpa [#allocation3], 0
    %11 = vsyncpa [#allocation8], 0
    %12 = vsyncpa [#allocation4], 0
    // Predicated region
    $region2: #{tpu_custom_call.1} parent=1 // pred_check
      _
    $region3: #{tpu_custom_call.1} parent=1 // pred_check_branch
      %14 = sbr.rel (0) target = $region5
    $region4: #{tpu_custom_call.1} parent=1 // pred_region
      %s16 = ssub.s32 16, 16
      %17 = vsyncadd [#allocation5], %s16
      %20 = dma.hbm_to_smem %s0, 16, [#allocation2], [#allocation5]
    $region5: #{tpu_custom_call.1} parent=1 // pred_fallthru
      _
    // Predicated region
    $region6: #{tpu_custom_call.1} parent=1 // pred_check
      _
    $region7: #{tpu_custom_call.1} parent=1 // pred_check_branch
      %22 = sbr.rel (0) target = $region9
    $region8: #{tpu_custom_call.1} parent=1 // pred_region
      %s24 = ssub.s32 128, 128
      %25 = vsyncadd [#allocation3], %s24
      %s27 = sshll.u32 [#allocation6], 4
      %s28 = int_to_ptr.vmem [resolvable:$true] %s27
      %30 = dma.hbm_to_vmem [thread:$0]  %s1, 128, %s28, [#allocation3]
    $region9: #{tpu_custom_call.1} parent=1 // pred_fallthru
      _
    // Predicated region
    $region10: #{tpu_custom_call.1} parent=1 // pred_check
      _
    $region11: #{tpu_custom_call.1} parent=1 // pred_check_branch
      %32 = sbr.rel (0) target = $region13
    $region12: #{tpu_custom_call.1} parent=1 // pred_region
      %s34 = ssub.s32 128, 128
      %35 = vsyncadd [#allocation8], %s34
      %s37 = sshll.u32 [#allocation7], 4
      %s38 = int_to_ptr.vmem [resolvable:$true] %s37
      %40 = dma.hbm_to_vmem [thread:$0]  %s2, 128, %s38, [#allocation8]
    $region13: #{tpu_custom_call.1} parent=1 // pred_fallthru
      _
    // Predicated region
    $region14: #{tpu_custom_call.1} parent=1 // pred_check
      _
    $region15: #{tpu_custom_call.1} parent=1 // pred_check_branch
      %42 = sbr.rel (0) target = $region17
    $region16: #{tpu_custom_call.1} parent=1 // pred_region
      %s44 = ssub.s32 128, 128
      %45 = vsyncadd [#allocation8], %s44
      %s47 = sshll.u32 [#allocation9], 4
      %s48 = int_to_ptr.vmem [resolvable:$true] %s47
      %50 = dma.hbm_to_vmem [thread:$0]  %s3, 128, %s48, [#allocation8]
    $region17: #{tpu_custom_call.1} parent=1 // pred_fallthru
      _
    // Predicated region
    $region18: #{tpu_custom_call.1} parent=1 // pred_check
      _
    $region19: #{tpu_custom_call.1} parent=1 // pred_check_branch
      %52 = sbr.rel (0) target = $region21
    $region20: #{tpu_custom_call.1} parent=1 // pred_region
      %53 = dma.done [#allocation5], 16
    $region21: #{tpu_custom_call.1} parent=1 // pred_fallthru
      _
    // Predicated region
    $region22: #{tpu_custom_call.1} parent=1 // pred_check
      _
    $region23: #{tpu_custom_call.1} parent=1 // pred_check_branch
      %55 = sbr.rel (0) target = $region25
    $region24: #{tpu_custom_call.1} parent=1 // pred_region
      %56 = dma.done [#allocation3], 128
    $region25: #{tpu_custom_call.1} parent=1 // pred_fallthru
      _
    // Predicated region
    $region26: #{tpu_custom_call.1} parent=1 // pred_check
      _
    $region27: #{tpu_custom_call.1} parent=1 // pred_check_branch
      %58 = sbr.rel (0) target = $region29
    $region28: #{tpu_custom_call.1} parent=1 // pred_region
      %59 = dma.done [#allocation8], 128
    $region29: #{tpu_custom_call.1} parent=1 // pred_fallthru
      _
    // Predicated region
    $region30: #{tpu_custom_call.1} parent=1 // pred_check
      _
    $region31: #{tpu_custom_call.1} parent=1 // pred_check_branch
      %61 = sbr.rel (0) target = $region33
    $region32: #{tpu_custom_call.1} parent=1 // pred_region
      %62 = dma.done [#allocation8], 128
    $region33: #{tpu_custom_call.1} parent=1 // pred_fallthru
      _
    %63 = sfence
    %s64 = sld [smem:[#allocation2]]
    %s65 = sld [smem:[#allocation2 + $0x1]]
    %v66 = vld [vmem:[#allocation6] sm:$0xff]
    %v67 = vld [vmem:[#allocation7] sm:$0xff]
    %v68 = vld [vmem:[#allocation9] sm:$0xff]
    %v69 = vrcp.pop %v66
    %v70 = vmul.f32 %v69, %v69
    %v71 = vmul.f32 %v66, %v66
    %v72 = vrsqrt.pop %v67
    %v73 = vmul.f32 %v67, %v72
    %v74 = vmul.f32 %v72, %v72
    %v75 = vstv %s64
    %v76 = vmul.f32 %v75, %v73
    %v77 = vmul.f32 %v76, %v70
    %v78 = vmul.f32 %v71, %v74
    %v79 = vmul.f32 %v78, -78.95683
    %v80 = vmul.f32 %v79, 1.442695
    %v81 = vpow.pop %v80
    %v82 = vmul.f32 %v77, %v81
    %v83 = vrcp.pop %v68
    %v84 = vstv %s65
    %v85 = vmul.f32 %v84, %v83
    %v86 = vmul.f32 %v68, %v68
    %v87 = vsub.f32 0.0, %v86
    %v88 = vmul.f32 %v87, %v70
    %v89 = vmul.f32 %v88, 1.442695
    %v90 = vpow.pop %v89
    %v91 = vmul.f32 %v85, %v90
    %v92 = vadd.f32 %v82, %v91
    %v93 = vrsqrt.pop %v92
    %v94 = vmul.f32 %v92, %v93
    %vm95 = vcmp.eq.f32.partialorder %v92, inf
    %v96 = vsel %vm95, %v92, %v94
    %vm97 = vcmp.eq.f32.partialorder %v92, 0.0
    %v98 = vand.u32 %v92, 2147483648
    %v99 = vsel %vm97, %v98, %v96
    %100 = vst [vmem:[#allocation10] sm:$0xff] %v99
    // Predicated region
    $region34: #{tpu_custom_call.1} parent=1 // pred_check
      _
    $region35: #{tpu_custom_call.1} parent=1 // pred_check_branch
      %102 = sbr.rel (0) target = $region37
    $region36: #{tpu_custom_call.1} parent=1 // pred_region
      %s104 = ssub.s32 128, 128
      %105 = vsyncadd [#allocation4], %s104
      %s107 = sshll.u32 [#allocation10], 4
      %s108 = int_to_ptr.vmem [resolvable:$true] %s107
      %110 = dma.vmem_to_hbm [thread:$0]  %s108, 128, %s4, [#allocation4]
    $region37: #{tpu_custom_call.1} parent=1 // pred_fallthru
      _
    // Predicated region
    $region38: #{tpu_custom_call.1} parent=1 // pred_check
      _
    $region39: #{tpu_custom_call.1} parent=1 // pred_check_branch
      %112 = sbr.rel (0) target = $region41
    $region40: #{tpu_custom_call.1} parent=1 // pred_region
      %113 = dma.done [#allocation4], 128
    $region41: #{tpu_custom_call.1} parent=1 // pred_fallthru
      _
    %114 = vsyncpa [#allocation3], 1
    %115 = vsyncpa [#allocation8], 1
    %116 = vsyncpa [#allocation4], 1
    %117 = vsyncpa [#allocation5], 1

</llo_original>
